<compile_context>
chip_gen: v5e
topology: v5e:2x2
jax: 0.10.0
libtpu: 0.0.40
codegen_flags: <defaults>
</compile_context>

<pallas_src>
import functools
import math

import jax
import jax.numpy as jnp
from jax import lax
from jax.experimental import pallas as pl
from jax.experimental.pallas import tpu as pltpu


# ----------------------------------------------------------------------------
# Kernel 1: GNN encoder.   grid = (batch_blocks,)
#   z = relu( relu(x @ W1 + b1)  <- adjacency ->  @ W2 + b2 )
# ----------------------------------------------------------------------------
def _encoder_kernel(x_ref, adj_ref, w1_ref, b1_ref, w2_ref, b2_ref, z_ref):
    bb, n, cin = x_ref.shape
    hid = w1_ref.shape[1]

    x = x_ref[...].reshape(bb * n, cin)
    h = jnp.dot(x, w1_ref[...], preferred_element_type=jnp.float32) + b1_ref[...]
    h = jnp.maximum(h, 0.0)                                        # relu(fc1)
    # batch-local adjacency matmul; adjacency is pre-summed 0.5*(A_out + A_in)
    g = jnp.einsum("bij,bjh->bih", adj_ref[...],
                   h.reshape(bb, n, hid).astype(adj_ref.dtype),
                   preferred_element_type=jnp.float32)
    z = jnp.dot(g.reshape(bb * n, hid).astype(w2_ref.dtype), w2_ref[...],
                preferred_element_type=jnp.float32) + b2_ref[...]
    z_ref[...] = jnp.maximum(z, 0.0).reshape(bb, n, hid)           # relu(fc2)


# ----------------------------------------------------------------------------
# Kernel 2: fused graph-transformer layers.   grid = (batch_blocks, num_layers)
#   z lives in a VMEM scratch accumulator across all layer steps.
# ----------------------------------------------------------------------------
def _layers_kernel(zin_ref, mask_ref, w_ref, b_ref, zout_ref, z_sc, *, num_heads):
    layer = pl.program_id(1)
    last = pl.num_programs(1) - 1
    bb, n, hid = z_sc.shape
    hd = hid // num_heads

    @pl.when(layer == 0)
    def _():
        z_sc[...] = zin_ref[...]

    # Additive key-padding bias: built & broadcast ONCE per grid step, reused
    # by every head (JAX does not CSE broadcast_in_dim).
    bias = jnp.where(mask_ref[...] == 0.0, jnp.float32(-1e30), jnp.float32(0.0))
    bias = jnp.broadcast_to(bias, (bb, n, n))

    w = w_ref[0]            # (H, 5H)  = [in_w (q cols pre-scaled) | out_w | lin_w]
    b = b_ref[0]            # (9, H) rows: qb*s, kb, vb, out_b, lin_b, g1, b1, g2, b2
    mm = w.dtype            # MXU operand dtype (f32 or bf16)

    zf = z_sc[...].reshape(bb * n, hid)                  # f32, VMEM-resident
    in_b = b[0:3, :].reshape(1, 3 * hid)                 # tiny (3,H) relayout
    qkv = jnp.dot(zf.astype(mm), w[:, :3 * hid],
                  preferred_element_type=jnp.float32) + in_b
    qkv = qkv.reshape(bb, n, 3 * hid)

    # Multi-head attention with the output projection folded per head:
    #   acc += softmax(q k^T + bias) v @ out_w[rows of head]
    # -> lane-dense f32 accumulator, no head_dim-wide masked stores.
    acc = jnp.zeros((bb * n, hid), jnp.float32)
    for h_i in range(num_heads):                         # static, small
        lo = h_i * hd
        q = qkv[:, :, lo:lo + hd].astype(mm)             # scale folded into Wq/bq
        k = qkv[:, :, hid + lo:hid + lo + hd].astype(mm)
        v = qkv[:, :, 2 * hid + lo:2 * hid + lo + hd].astype(mm)
        s = jnp.einsum("bnd,bmd->bnm", q, k,
                       preferred_element_type=jnp.float32) + bias
        s = s - jnp.max(s, axis=-1, keepdims=True)
        e = jnp.exp(s)
        p = e * pl.reciprocal(jnp.sum(e, axis=-1, keepdims=True), approx=True)
        pv = jnp.einsum("bnm,bmd->bnd", p.astype(mm), v,
                        preferred_element_type=jnp.float32)
        acc = acc + jnp.dot(pv.reshape(bb * n, hd).astype(mm),
                            w[lo:lo + hd, 3 * hid:4 * hid],
                            preferred_element_type=jnp.float32)
    attn = acc + b[3:4, :]

    def _layer_norm(t, gamma, beta):                     # f32 element-wise (v5e-safe)
        mu = jnp.mean(t, axis=-1, keepdims=True)
        var = jnp.mean((t - mu) ** 2, axis=-1, keepdims=True)
        return (t - mu) * lax.rsqrt(var + 1e-5) * gamma + beta

    x1 = _layer_norm(zf + attn, b[5:6, :], b[6:7, :])
    lin = jnp.dot(x1.astype(mm), w[:, 4 * hid:],
                  preferred_element_type=jnp.float32) + b[4:5, :]
    x2 = _layer_norm(x1 + lin, b[7:8, :], b[8:9, :])
    z_sc[...] = x2.reshape(bb, n, hid)

    @pl.when(layer == last)
    def _():
        zout_ref[...] = x2.reshape(bb, n, hid)


# ----------------------------------------------------------------------------
# Kernel 3: edge decoder.   grid = (batch_blocks,)
#   edge[b,i,j] = z[b,i]·w_src + z[b,j]·w_dst + bias
# ----------------------------------------------------------------------------
def _decoder_kernel(z_ref, dw_ref, db_ref, edge_ref):
    bb, n, hid = z_ref.shape
    dw = dw_ref[...]                                     # (H, 2) = [w_src | w_dst]
    proj = jnp.dot(z_ref[...].reshape(bb * n, hid).astype(dw.dtype), dw,
                   preferred_element_type=jnp.float32).reshape(bb, n, 2)
    edge_ref[...] = (proj[:, :, 0:1]
                     + jnp.swapaxes(proj[:, :, 1:2], 1, 2)
                     + db_ref[0])                        # scalar bias from SMEM


# ----------------------------------------------------------------------------
# Wrapper glue: batch-block / VMEM sizing, weight coalescing, 3 pallas_calls
# ----------------------------------------------------------------------------
def _round_up(v, m):
    return -(-v // m) * m


def _choose_batch_block(B, N, Hd, requested, phys_vmem):
    if requested is not None:
        assert B % requested == 0
        return requested
    # rough per-batch-element footprint of the layer kernel's live tensors
    per_b = (2 * N * N + 8 * N * Hd) * 4
    budget = min(phys_vmem // 3, 24 << 20)
    max_bb = max(1, budget // max(per_b, 1))
    best = 1
    for d in range(1, B + 1):
        if B % d:
            continue
        if d > max_bb:
            break
        if B // d >= 2:              # keep >=2 batch blocks for megacore / 2-TC sharding
            best = d
        if d * N >= 256:             # enough MXU M-rows (v6e/v7x height); stop growing
            break
    return best


def _vmem_limit(bb, N, Hd, Cin, mm_bytes, phys_vmem):
    f = 4
    est = 0
    est += 2 * 2 * bb * N * Hd * f                     # layer kernel: z in/out double buffers
    est += bb * N * Hd * f                             # z scratch
    est += 2 * (5 * Hd * Hd * mm_bytes + 9 * Hd * f)   # coalesced per-layer weight buffers
    est += bb * (2 * N * N + 6 * N * Hd) * f           # score/softmax + qkv/acc temporaries
    est += 2 * bb * N * (N + Cin) * mm_bytes           # encoder adj/x blocks (separate call)
    est += 2 * bb * N * N * f                          # decoder edge output blocks
    est = int(est * 1.25) + (4 << 20)
    cap = max(32 << 20, phys_vmem - (16 << 20))        # leave headroom on v7x (64 MiB part)
    return int(min(max(est, 32 << 20), cap, 100 << 20))


def graph_edge_predictor(x, adj_out, adj_in, node_mask, params, *,
                         batch_block=None, matmul_dtype=jnp.float32,
                         vmem_limit_bytes=None):
    B, N0, Cin = x.shape
    Hd = params["enc_w1"].shape[1]
    layers = params["layers"]
    L = len(layers)
    nh = params["num_heads"]
    assert L >= 1 and Hd % nh == 0
    hd = Hd // nh

    mm = matmul_dtype
    f32 = jnp.float32
    mm_bytes = jnp.dtype(mm).itemsize

    try:
        phys_vmem = int(pltpu.get_tpu_info().vmem_capacity_bytes)
    except Exception:
        phys_vmem = 128 << 20

    # ---- one-off wrapper prep (pure JAX glue) ----
    # Pad node axis to a sublane multiple so (bb,N,H)->(bb*N,H) reshapes stay
    # layout views; padded nodes are masked out and sliced off the outputs.
    # (Lane-padding N to 128 only pays off for large graphs; left as a knob.)
    N = _round_up(N0, 8)
    pad = N - N0
    adj_sum = (adj_out + adj_in) * 0.5                   # one matmul / one DMA in the encoder
    mask = node_mask
    x_in = x
    if pad:
        x_in = jnp.pad(x_in, ((0, 0), (0, pad), (0, 0)))
        adj_sum = jnp.pad(adj_sum, ((0, 0), (0, pad), (0, pad)))
        mask = jnp.pad(mask, ((0, 0), (0, pad)))

    bb = _choose_batch_block(B, N, Hd, batch_block, phys_vmem)
    nb = B // bb
    if vmem_limit_bytes is None:
        vmem_limit_bytes = _vmem_limit(bb, N, Hd, Cin, mm_bytes, phys_vmem)

    x_mm = x_in.astype(mm)
    adj_mm = adj_sum.astype(mm)      # exact for 0/0.5/1; weighted adjacency loses bits in bf16
    mask3 = mask.reshape(B, 1, N).astype(f32)

    enc_w1 = params["enc_w1"].astype(mm)
    enc_b1 = params["enc_b1"].reshape(1, Hd).astype(f32)
    enc_w2 = params["enc_w2"].astype(mm)
    enc_b2 = params["enc_b2"].reshape(1, Hd).astype(f32)

    # Coalesce per-layer tensors: one (L,H,5H) weight slab + one (L,9,H) bias/LN
    # slab -> 2 per-layer DMAs per grid step instead of ~14.  The attention
    # scale 1/sqrt(head_dim) is folded into the q columns / q bias.
    scale = 1.0 / math.sqrt(hd)
    w_slabs, b_slabs = [], []
    for lp in layers:
        in_w = lp["in_w"].T.at[:, :Hd].multiply(scale)            # (H, 3H), q cols scaled
        in_b = lp["in_b"].at[:Hd].multiply(scale)
        w_slabs.append(jnp.concatenate([in_w, lp["out_w"].T, lp["lin_w"].T], axis=1))
        b_slabs.append(jnp.stack([
            in_b[:Hd], in_b[Hd:2 * Hd], in_b[2 * Hd:],
            lp["out_b"], lp["lin_b"],
            lp["ln1_w"], lp["ln1_b"], lp["ln2_w"], lp["ln2_b"]], axis=0))
    w_all = jnp.stack(w_slabs).astype(mm)                          # (L, H, 5H)
    b_all = jnp.stack(b_slabs).astype(f32)                         # (L, 9, H)

    dec_w = jnp.stack([params["dec_w"][0, :Hd], params["dec_w"][0, Hd:]],
                      axis=1).astype(mm)                           # (H, 2)
    dec_b = params["dec_b"].reshape(1).astype(f32)                 # scalar -> SMEM

    cp1 = pltpu.CompilerParams(dimension_semantics=("parallel",),
                               vmem_limit_bytes=vmem_limit_bytes)
    cp2 = pltpu.CompilerParams(dimension_semantics=("parallel", "arbitrary"),
                               vmem_limit_bytes=vmem_limit_bytes)

    def batched(shape):
        return pl.BlockSpec(shape, lambda i: tuple([i] + [0] * (len(shape) - 1)))

    def const(shape):
        return pl.BlockSpec(shape, lambda i: (0,) * len(shape))

    def batched2(shape):
        return pl.BlockSpec(shape, lambda i, l: tuple([i] + [0] * (len(shape) - 1)))

    def per_layer(shape):
        return pl.BlockSpec(shape, lambda i, l: tuple([l] + [0] * (len(shape) - 1)))

    # ------------------------------ encoder ------------------------------
    z0 = pl.pallas_call(
        _encoder_kernel,
        out_shape=jax.ShapeDtypeStruct((B, N, Hd), f32),
        grid_spec=pltpu.PrefetchScalarGridSpec(
            num_scalar_prefetch=0, grid=(nb,),
            in_specs=[batched((bb, N, Cin)),
                      batched((bb, N, N)),
                      const((Cin, Hd)), const((1, Hd)),
                      const((Hd, Hd)), const((1, Hd))],
            out_specs=batched((bb, N, Hd))),
        compiler_params=cp1,
    )(x_mm, adj_mm, enc_w1, enc_b1, enc_w2, enc_b2)

    # ------------------------ fused transformer layers --------------------
    z = pl.pallas_call(
        functools.partial(_layers_kernel, num_heads=nh),
        out_shape=jax.ShapeDtypeStruct((B, N, Hd), f32),
        grid_spec=pltpu.PrefetchScalarGridSpec(
            num_scalar_prefetch=0, grid=(nb, L),
            in_specs=[batched2((bb, N, Hd)),          # z from encoder
                      batched2((bb, 1, N)),           # node mask
                      per_layer((1, Hd, 5 * Hd)),     # coalesced per-layer weights
                      per_layer((1, 9, Hd))],         # coalesced per-layer biases / LN
            out_specs=batched2((bb, N, Hd)),
            scratch_shapes=[pltpu.VMEM((bb, N, Hd), f32)]),   # layer-resident z
        compiler_params=cp2,
    )(z0, mask3, w_all, b_all)

    # ------------------------------ decoder ------------------------------
    edge = pl.pallas_call(
        _decoder_kernel,
        out_shape=jax.ShapeDtypeStruct((B, N, N), f32),
        grid_spec=pltpu.PrefetchScalarGridSpec(
            num_scalar_prefetch=0, grid=(nb,),
            in_specs=[batched((bb, N, Hd)),
                      const((Hd, 2)),
                      pl.BlockSpec(memory_space=pltpu.MemorySpace.SMEM)],
            out_specs=batched((bb, N, N))),
        compiler_params=cp1,
    )(z, dec_w, dec_b)

    if pad:
        edge = edge[:, :N0, :N0]
        z = z[:, :N0, :]
    return edge, z


# ----------------------------------------------------------------------------
# Deterministic parameter initialization (shapes follow the PyTorch __init__)
# ----------------------------------------------------------------------------
def init_params(key, in_channels, hidden, num_heads, num_layers):
    keys = iter(jax.random.split(key, 8 + 8 * num_layers))

    def w(shape, scale=0.1):
        return (scale * jax.random.normal(next(keys), shape)).astype(jnp.float32)

    params = dict(
        num_heads=num_heads,
        enc_w1=w((in_channels, hidden)), enc_b1=w((hidden,)),
        enc_w2=w((hidden, hidden)), enc_b2=w((hidden,)),
        dec_w=w((1, 2 * hidden)), dec_b=w((1,)),
        layers=[],
    )
    for _ in range(num_layers):
        params["layers"].append(dict(
            in_w=w((3 * hidden, hidden)), in_b=w((3 * hidden,)),
            out_w=w((hidden, hidden)), out_b=w((hidden,)),
            lin_w=w((hidden, hidden)), lin_b=w((hidden,)),
            ln1_w=jnp.ones((hidden,), jnp.float32), ln1_b=jnp.zeros((hidden,), jnp.float32),
            ln2_w=jnp.ones((hidden,), jnp.float32), ln2_b=jnp.zeros((hidden,), jnp.float32),
        ))
    return params


# ----------------------------------------------------------------------------
# Pure-JAX reference (same math) for correctness checks
# ----------------------------------------------------------------------------
def reference_forward(x, adj_out, adj_in, node_mask, params):
    h = jax.nn.relu(x @ params["enc_w1"] + params["enc_b1"])
    g = (jnp.einsum("bij,bjh->bih", adj_out, h)
         + jnp.einsum("bij,bjh->bih", adj_in, h)) * 0.5
    z = jax.nn.relu(g @ params["enc_w2"] + params["enc_b2"])
    H = z.shape[-1]
    nh = params["num_heads"]
    hd = H // nh
    bias = jnp.where(node_mask[:, None, :] == 0, -1e30, 0.0)
    for lp in params["layers"]:
        qkv = z @ lp["in_w"].T + lp["in_b"]
        q, k, v = qkv[..., :H], qkv[..., H:2 * H], qkv[..., 2 * H:]
        sp = lambda t: t.reshape(t.shape[0], t.shape[1], nh, hd)
        s = jnp.einsum("bnhd,bmhd->bhnm", sp(q), sp(k)) / math.sqrt(hd) + bias[:, None, :, :]
        p = jax.nn.softmax(s, axis=-1)
        o = jnp.einsum("bhnm,bmhd->bnhd", p, sp(v)).reshape(z.shape)
        attn = o @ lp["out_w"].T + lp["out_b"]

        def ln(t, g_, b_):
            mu = jnp.mean(t, -1, keepdims=True)
            var = jnp.mean((t - mu) ** 2, -1, keepdims=True)
            return (t - mu) / jnp.sqrt(var + 1e-5) * g_ + b_

        x1 = ln(z + attn, lp["ln1_w"], lp["ln1_b"])
        lin = x1 @ lp["lin_w"].T + lp["lin_b"]
        z = ln(x1 + lin, lp["ln2_w"], lp["ln2_b"])
    wa = params["dec_w"][0, :H][:, None]
    wb = params["dec_w"][0, H:][:, None]
    logits = (z @ wa) + jnp.swapaxes(z @ wb, 1, 2) + params["dec_b"][0]
    return logits, z


if __name__ == "__main__":
    B, N, CIN, HID, HEADS, LAYERS = 4, 8, 16, 32, 4, 2

    key = jax.random.PRNGKey(0)
    kx, ka, kb, kp = jax.random.split(key, 4)
    x = jax.random.normal(kx, (B, N, CIN), dtype=jnp.float32)
    adj_out = (jax.random.uniform(ka, (B, N, N)) > 0.5).astype(jnp.float32)
    adj_in = (jax.random.uniform(kb, (B, N, N)) > 0.5).astype(jnp.float32)
    # NOTE: mask test in-kernel is an exact 0.0 compare -> mask must be 0/1.
    node_mask = jnp.ones((B, N), dtype=jnp.float32)
    node_mask = node_mask.at[1, 6:].set(0.0).at[3, 5:].set(0.0)

    params = init_params(kp, CIN, HID, HEADS, LAYERS)

    ref_logits, ref_z = reference_forward(x, adj_out, adj_in, node_mask, params)

    # f32 MXU operands (tight check; approx-reciprocal softmax allowed for).
    logits32, z32 = graph_edge_predictor(x, adj_out, adj_in, node_mask, params,
                                         matmul_dtype=jnp.float32)
    jax.block_until_ready(logits32)
    jax.block_until_ready(z32)
    assert jnp.allclose(logits32, ref_logits, rtol=2e-2, atol=2e-2)
    assert jnp.allclose(z32, ref_z, rtol=2e-2, atol=2e-2)

    # bf16 MXU operands, f32 accumulation + f32 element-wise math (looser check).
    logits16, z16 = graph_edge_predictor(x, adj_out, adj_in, node_mask, params,
                                         matmul_dtype=jnp.bfloat16)
    jax.block_until_ready(logits16)
    jax.block_until_ready(z16)
    assert jnp.allclose(logits16, ref_logits, rtol=8e-2, atol=8e-2)
    assert jnp.allclose(z16, ref_z, rtol=8e-2, atol=8e-2)

    print("KERNEL_OK")
</pallas_src>

<mosaic_0001>
module attributes {stable_mosaic.version = 11 : i64} {
  func.func @_encoder_kernel(%arg0: i32, %arg1: memref<2x8x16xf32, #tpu.memory_space<vmem>>, %arg2: memref<2x8x8xf32, #tpu.memory_space<vmem>>, %arg3: memref<16x32xf32, #tpu.memory_space<vmem>>, %arg4: memref<1x32xf32, #tpu.memory_space<vmem>>, %arg5: memref<32x32xf32, #tpu.memory_space<vmem>>, %arg6: memref<1x32xf32, #tpu.memory_space<vmem>>, %arg7: memref<2x8x32xf32, #tpu.memory_space<vmem>>) attributes {dimension_semantics = [#tpu.dimension_semantics<parallel>], iteration_bounds = array<i64: 2>, scalar_prefetch = 0 : i64, scratch_operands = 0 : i64, tpu.core_type = #tpu.core_type<tc>, window_params = [{transform_indices = @transform_0, window_bounds = array<i64: 2, 8, 16>}, {transform_indices = @transform_1, window_bounds = array<i64: 2, 8, 8>}, {pipeline_mode = #tpu.pipeline_mode<synchronous>, transform_indices = @transform_2, window_bounds = array<i64: 16, 32>}, {pipeline_mode = #tpu.pipeline_mode<synchronous>, transform_indices = @transform_3, window_bounds = array<i64: 1, 32>}, {pipeline_mode = #tpu.pipeline_mode<synchronous>, transform_indices = @transform_4, window_bounds = array<i64: 32, 32>}, {pipeline_mode = #tpu.pipeline_mode<synchronous>, transform_indices = @transform_5, window_bounds = array<i64: 1, 32>}, {transform_indices = @transform_6, window_bounds = array<i64: 2, 8, 32>}]} {
    %c0 = arith.constant 0 : index
    %c0_0 = arith.constant 0 : index
    %c0_1 = arith.constant 0 : index
    %0 = vector.load %arg1[%c0, %c0_0, %c0_1] : memref<2x8x16xf32, #tpu.memory_space<vmem>>, vector<2x8x16xf32>
    %1 = vector.shape_cast %0 : vector<2x8x16xf32> to vector<16x16xf32>
    %c0_2 = arith.constant 0 : index
    %c0_3 = arith.constant 0 : index
    %2 = vector.load %arg3[%c0_2, %c0_3] : memref<16x32xf32, #tpu.memory_space<vmem>>, vector<16x32xf32>
    %cst = arith.constant dense<0.000000e+00> : vector<16x32xf32>
    %3 = tpu.matmul %1, %2, %cst {dimension_numbers = #tpu.dot_dimension_numbers<[1], [0], [0], [1], [0, 0, 1, 1], [], []>} : vector<16x16xf32>, vector<16x32xf32>, vector<16x32xf32> -> vector<16x32xf32>
    %c0_4 = arith.constant 0 : index
    %c0_5 = arith.constant 0 : index
    %4 = vector.load %arg4[%c0_4, %c0_5] : memref<1x32xf32, #tpu.memory_space<vmem>>, vector<1x32xf32>
    %5 = vector.broadcast %4 : vector<1x32xf32> to vector<16x32xf32>
    %6 = arith.addf %3, %5 : vector<16x32xf32>
    %cst_6 = arith.constant 0.000000e+00 : f32
    %7 = vector.broadcast %cst_6 : f32 to vector<16x32xf32>
    %8 = arith.maximumf %6, %7 : vector<16x32xf32>
    %c0_7 = arith.constant 0 : index
    %c0_8 = arith.constant 0 : index
    %c0_9 = arith.constant 0 : index
    %9 = vector.load %arg2[%c0_7, %c0_8, %c0_9] : memref<2x8x8xf32, #tpu.memory_space<vmem>>, vector<2x8x8xf32>
    %10 = vector.shape_cast %8 : vector<16x32xf32> to vector<2x8x32xf32>
    "tpu.trace_start"() <{level = 10 : i32, message = "bij,bjh->bih"}> : () -> ()
    %cst_10 = arith.constant dense<0.000000e+00> : vector<2x8x32xf32>
    %11 = tpu.matmul %9, %10, %cst_10 {dimension_numbers = #tpu.dot_dimension_numbers<[2], [1], [1], [2], [0, 0, 0, 1, 1, 2], [0], [0]>} : vector<2x8x8xf32>, vector<2x8x32xf32>, vector<2x8x32xf32> -> vector<2x8x32xf32>
    "tpu.trace_stop"() : () -> ()
    %12 = vector.shape_cast %11 : vector<2x8x32xf32> to vector<16x32xf32>
    %c0_11 = arith.constant 0 : index
    %c0_12 = arith.constant 0 : index
    %13 = vector.load %arg5[%c0_11, %c0_12] : memref<32x32xf32, #tpu.memory_space<vmem>>, vector<32x32xf32>
    %cst_13 = arith.constant dense<0.000000e+00> : vector<16x32xf32>
    %14 = tpu.matmul %12, %13, %cst_13 {dimension_numbers = #tpu.dot_dimension_numbers<[1], [0], [0], [1], [0, 0, 1, 1], [], []>} : vector<16x32xf32>, vector<32x32xf32>, vector<16x32xf32> -> vector<16x32xf32>
    %c0_14 = arith.constant 0 : index
    %c0_15 = arith.constant 0 : index
    %15 = vector.load %arg6[%c0_14, %c0_15] : memref<1x32xf32, #tpu.memory_space<vmem>>, vector<1x32xf32>
    %16 = vector.broadcast %15 : vector<1x32xf32> to vector<16x32xf32>
    %17 = arith.addf %14, %16 : vector<16x32xf32>
    %cst_16 = arith.constant 0.000000e+00 : f32
    %18 = vector.broadcast %cst_16 : f32 to vector<16x32xf32>
    %19 = arith.maximumf %17, %18 : vector<16x32xf32>
    %20 = vector.shape_cast %19 : vector<16x32xf32> to vector<2x8x32xf32>
    %c0_17 = arith.constant 0 : index
    %c0_18 = arith.constant 0 : index
    %c0_19 = arith.constant 0 : index
    %21 = vector.load %arg7[%c0_17, %c0_18, %c0_19] : memref<2x8x32xf32, #tpu.memory_space<vmem>>, vector<2x8x32xf32>
    tpu.vector_store %arg7[%c0_17, %c0_18, %c0_19], %20 {strides = array<i32>} : memref<2x8x32xf32, #tpu.memory_space<vmem>>, vector<2x8x32xf32>,
    return
  }
  func.func @transform_0(%arg0: i32) -> (i32, i32, i32) {
    %c0_i32 = arith.constant 0 : i32
    %c0_i32_0 = arith.constant 0 : i32
    %c0_i32_1 = arith.constant 0 : i32
    return %arg0, %c0_i32, %c0_i32_0 : i32, i32, i32
  }
  func.func @transform_1(%arg0: i32) -> (i32, i32, i32) {
    %c0_i32 = arith.constant 0 : i32
    %c0_i32_0 = arith.constant 0 : i32
    %c0_i32_1 = arith.constant 0 : i32
    return %arg0, %c0_i32, %c0_i32_0 : i32, i32, i32
  }
  func.func @transform_2(%arg0: i32) -> (i32, i32) {
    %c0_i32 = arith.constant 0 : i32
    %c0_i32_0 = arith.constant 0 : i32
    %c0_i32_1 = arith.constant 0 : i32
    return %c0_i32, %c0_i32_0 : i32, i32
  }
  func.func @transform_3(%arg0: i32) -> (i32, i32) {
    %c0_i32 = arith.constant 0 : i32
    %c0_i32_0 = arith.constant 0 : i32
    %c0_i32_1 = arith.constant 0 : i32
    return %c0_i32, %c0_i32_0 : i32, i32
  }
  func.func @transform_4(%arg0: i32) -> (i32, i32) {
    %c0_i32 = arith.constant 0 : i32
    %c0_i32_0 = arith.constant 0 : i32
    %c0_i32_1 = arith.constant 0 : i32
    return %c0_i32, %c0_i32_0 : i32, i32
  }
  func.func @transform_5(%arg0: i32) -> (i32, i32) {
    %c0_i32 = arith.constant 0 : i32
    %c0_i32_0 = arith.constant 0 : i32
    %c0_i32_1 = arith.constant 0 : i32
    return %c0_i32, %c0_i32_0 : i32, i32
  }
  func.func @transform_6(%arg0: i32) -> (i32, i32, i32) {
    %c0_i32 = arith.constant 0 : i32
    %c0_i32_0 = arith.constant 0 : i32
    %c0_i32_1 = arith.constant 0 : i32
    return %arg0, %c0_i32, %c0_i32_0 : i32, i32, i32
  }
}

</mosaic_0001>

<llo_original>
// kernel: tpu_custom_call.1
$region0: #{tpu_custom_call.1}
  #allocation0 [shape = 'u32[]', space=smem, size = 0x4, offset = 0x4, fixed_abs, tag = 'smem constant byte address 0x4 - core index']
  #allocation1 [shape = 'u32[72,128]{1,0:T(1,128)}', space=vmem, size = 0x9000, scoped, tag = 'internal scratch']
  %s0 = inlined_call_operand.hbm [shape: f32[4,8,16], index: 0, kind: input, shape index: {}]
  %s1 = inlined_call_operand.hbm [shape: f32[4,8,8], index: 1, kind: input, shape index: {}]
  %s2 = inlined_call_operand.hbm [shape: f32[16,32], index: 2, kind: input, shape index: {}]
  %s3 = inlined_call_operand.vmem [shape: f32[1,32], index: 3, kind: input, shape index: {}]
  %s4 = inlined_call_operand.hbm [shape: f32[32,32], index: 4, kind: input, shape index: {}]
  %s5 = inlined_call_operand.vmem [shape: f32[1,32], index: 5, kind: input, shape index: {}]
  %s6 = inlined_call_operand.hbm [shape: f32[4,8,32], index: 6, kind: output, shape index: {}]
  %s7 = sld [smem:[#allocation0]]
  $region73: #{tpu_custom_call.1} parent=0
    _
  %s9 = ssub.s32 1, %s7
  %s10 = scalar_select 0, %s9, %s7
  $region1: #{tpu_custom_call.1} parent=0
    #allocation2 [shape = 'u8[16384]{0}', space=vmem, size = 0x4000, scoped, tag = 'input window, operand 0']
    #allocation3 [shape = 's32[2]{0}', space=sflag, size = 0x8, scoped, tag = 'scoped memory for tpu_custom_call.1']
    #allocation4 [shape = 's32[2]{0}', space=sflag, size = 0x8, scoped, tag = 'scoped memory for tpu_custom_call.1']
    #allocation5 [shape = 'u8[16384]{0}', space=vmem, size = 0x4000, scoped, tag = 'input window, operand 1']
    #allocation6 [shape = 's32[2]{0}', space=sflag, size = 0x8, scoped, tag = 'scoped memory for tpu_custom_call.1']
    #allocation7 [shape = 'u8[8192]{0}', space=vmem, size = 0x2000, scoped, tag = 'input window, operand 2, single buffered']
    #allocation8 [shape = 'u8[16384]{0}', space=vmem, size = 0x4000, scoped, tag = 'input window, operand 4, single buffered']
    #allocation9 [shape = 's32[1]{0}', space=sflag, size = 0x4, scoped, tag = 'scoped memory for tpu_custom_call.1']
    #allocation10 [shape = 'u8[16384]{0}', space=vmem, size = 0x4000, scoped, tag = 'output window, operand 0']
    %11 = vsyncpa [#allocation3], 0
    %s12 = scalar_lea.sflag [#allocation3], 1
    %13 = vsyncpa %s12, 0
    %14 = vsyncpa [#allocation6], 0
    %s15 = scalar_lea.sflag [#allocation6], 1
    %16 = vsyncpa %s15, 0
    %17 = vsyncpa [#allocation9], 0
    %18 = vsyncpa [#allocation4], 0
    %s19 = scalar_lea.sflag [#allocation4], 1
    %20 = vsyncpa %s19, 0
    loop: start=0, step=1, limit=4
    $region2: #{tpu_custom_call.1} parent=1 // loop_pre_header
      _
    $region3: #{tpu_custom_call.1} parent=1 // loop_header
      %s22 = sphi 0, %s26
      %p23 = scmp.ge.s32.totalorder %s22, 4
      %s32 = sphi 0, %s34
      %s35 = sphi 0, %s32
      %s36 = sphi 0, %s35
      %s52 = sphi 0, %s36
      %s58 = sphi 0, %s60
      %s61 = sphi 0, %s58
      %s62 = sphi 0, %s61
      %s78 = sphi 0, %s62
      %s82 = sphi 0, %s82
      %s84 = sphi 0, %s82
      %s85 = sphi 0, %s84
      %s99 = sphi 0, %s85
      %s103 = sphi 0, %s103
      %s105 = sphi 0, %s103
      %s106 = sphi 0, %s105
      %s120 = sphi 0, %s106
      %s124 = sphi 0, %s124
      %s126 = sphi 0, %s124
      %s127 = sphi 0, %s126
      %s141 = sphi 0, %s127
      %s145 = sphi 0, %s145
      %s147 = sphi 0, %s145
      %s148 = sphi 0, %s147
      %s162 = sphi 0, %s148
      %s168 = sphi 0, %s170
      %s171 = sphi 0, %s168
      %s172 = sphi 0, %s171
      %s188 = sphi 0, %s172
    $region4: #{tpu_custom_call.1} parent=1 // loop_header_branch
      %25 = sbr.rel (%p23) target = $region8
    $region5: #{tpu_custom_call.1} parent=1 // loop_body
      %s27 = ssub.s32 %s22, 1
      %s28 = ssub.s32 %s22, 2
      %s29 = sadd.s32 %s22, 1
      %s30 = ssub.s32 %s22, %s29
      %p31 = scmp.eq.s32.totalorder %s30, 0
      %s33 = sadd.s32 %s32, 1
      %s34 = scalar_select %p31, %s32, %s33
      %p37 = pneg %p31
      %p38 = scmp.eq.s32.totalorder %s22, 1
      %p39 = por %p37, %p38
      %p40 = scmp.ne.s32.totalorder %s32, %s35
      %p41 = scmp.eq.s32.totalorder %s22, 0
      %p42 = por %p40, %p41
      %p43 = scmp.ne.s32.totalorder %s32, %s35
      %p44 = scmp.eq.s32.totalorder %s27, 1
      %p45 = por %p43, %p44
      %p46 = scmp.ne.s32.totalorder %s35, %s36
      %p47 = scmp.eq.s32.totalorder %s27, 0
      %p48 = por %p46, %p47
      %p49 = scmp.ne.s32.totalorder %s35, %s36
      %p50 = scmp.eq.s32.totalorder %s28, 1
      %p51 = por %p49, %p50
      %p53 = scmp.ne.s32.totalorder %s36, %s52
      %p54 = scmp.eq.s32.totalorder %s28, 0
      %p55 = por %p53, %p54
      %s56 = ssub.s32 %s22, %s29
      %p57 = scmp.eq.s32.totalorder %s56, 0
      %s59 = sadd.s32 %s58, 1
      %s60 = scalar_select %p57, %s58, %s59
      %p63 = pneg %p57
      %p64 = scmp.eq.s32.totalorder %s22, 1
      %p65 = por %p63, %p64
      %p66 = scmp.ne.s32.totalorder %s58, %s61
      %p67 = scmp.eq.s32.totalorder %s22, 0
      %p68 = por %p66, %p67
      %p69 = scmp.ne.s32.totalorder %s58, %s61
      %p70 = scmp.eq.s32.totalorder %s27, 1
      %p71 = por %p69, %p70
      %p72 = scmp.ne.s32.totalorder %s61, %s62
      %p73 = scmp.eq.s32.totalorder %s27, 0
      %p74 = por %p72, %p73
      %p75 = scmp.ne.s32.totalorder %s61, %s62
      %p76 = scmp.eq.s32.totalorder %s28, 1
      %p77 = por %p75, %p76
      %p79 = scmp.ne.s32.totalorder %s62, %s78
      %p80 = scmp.eq.s32.totalorder %s28, 0
      %p81 = por %p79, %p80
      %s83 = sadd.s32 %s82, 1
      %p86 = scmp.eq.s32.totalorder %s22, 1
      %p87 = scmp.ne.s32.totalorder %s82, %s84
      %p88 = scmp.eq.s32.totalorder %s22, 0
      %p89 = por %p87, %p88
      %p90 = scmp.ne.s32.totalorder %s82, %s84
      %p91 = scmp.eq.s32.totalorder %s27, 1
      %p92 = por %p90, %p91
      %p93 = scmp.ne.s32.totalorder %s84, %s85
      %p94 = scmp.eq.s32.totalorder %s27, 0
      %p95 = por %p93, %p94
      %p96 = scmp.ne.s32.totalorder %s84, %s85
      %p97 = scmp.eq.s32.totalorder %s28, 1
      %p98 = por %p96, %p97
      %p100 = scmp.ne.s32.totalorder %s85, %s99
      %p101 = scmp.eq.s32.totalorder %s28, 0
      %p102 = por %p100, %p101
      %s104 = sadd.s32 %s103, 1
      %p107 = scmp.eq.s32.totalorder %s22, 1
      %p108 = scmp.ne.s32.totalorder %s103, %s105
      %p109 = scmp.eq.s32.totalorder %s22, 0
      %p110 = por %p108, %p109
      %p111 = scmp.ne.s32.totalorder %s103, %s105
      %p112 = scmp.eq.s32.totalorder %s27, 1
      %p113 = por %p111, %p112
      %p114 = scmp.ne.s32.totalorder %s105, %s106
      %p115 = scmp.eq.s32.totalorder %s27, 0
      %p116 = por %p114, %p115
      %p117 = scmp.ne.s32.totalorder %s105, %s106
      %p118 = scmp.eq.s32.totalorder %s28, 1
      %p119 = por %p117, %p118
      %p121 = scmp.ne.s32.totalorder %s106, %s120
      %p122 = scmp.eq.s32.totalorder %s28, 0
      %p123 = por %p121, %p122
      %s125 = sadd.s32 %s124, 1
      %p128 = scmp.eq.s32.totalorder %s22, 1
      %p129 = scmp.ne.s32.totalorder %s124, %s126
      %p130 = scmp.eq.s32.totalorder %s22, 0
      %p131 = por %p129, %p130
      %p132 = scmp.ne.s32.totalorder %s124, %s126
      %p133 = scmp.eq.s32.totalorder %s27, 1
      %p134 = por %p132, %p133
      %p135 = scmp.ne.s32.totalorder %s126, %s127
      %p136 = scmp.eq.s32.totalorder %s27, 0
      %p137 = por %p135, %p136
      %p138 = scmp.ne.s32.totalorder %s126, %s127
      %p139 = scmp.eq.s32.totalorder %s28, 1
      %p140 = por %p138, %p139
      %p142 = scmp.ne.s32.totalorder %s127, %s141
      %p143 = scmp.eq.s32.totalorder %s28, 0
      %p144 = por %p142, %p143
      %s146 = sadd.s32 %s145, 1
      %p149 = scmp.eq.s32.totalorder %s22, 1
      %p150 = scmp.ne.s32.totalorder %s145, %s147
      %p151 = scmp.eq.s32.totalorder %s22, 0
      %p152 = por %p150, %p151
      %p153 = scmp.ne.s32.totalorder %s145, %s147
      %p154 = scmp.eq.s32.totalorder %s27, 1
      %p155 = por %p153, %p154
      %p156 = scmp.ne.s32.totalorder %s147, %s148
      %p157 = scmp.eq.s32.totalorder %s27, 0
      %p158 = por %p156, %p157
      %p159 = scmp.ne.s32.totalorder %s147, %s148
      %p160 = scmp.eq.s32.totalorder %s28, 1
      %p161 = por %p159, %p160
      %p163 = scmp.ne.s32.totalorder %s148, %s162
      %p164 = scmp.eq.s32.totalorder %s28, 0
      %p165 = por %p163, %p164
      %s166 = ssub.s32 %s22, %s29
      %p167 = scmp.eq.s32.totalorder %s166, 0
      %s169 = sadd.s32 %s168, 1
      %s170 = scalar_select %p167, %s168, %s169
      %p173 = pneg %p167
      %p174 = scmp.eq.s32.totalorder %s22, 1
      %p175 = por %p173, %p174
      %p176 = scmp.ne.s32.totalorder %s168, %s171
      %p177 = scmp.eq.s32.totalorder %s22, 0
      %p178 = por %p176, %p177
      %p179 = scmp.ne.s32.totalorder %s168, %s171
      %p180 = scmp.eq.s32.totalorder %s27, 1
      %p181 = por %p179, %p180
      %p182 = scmp.ne.s32.totalorder %s171, %s172
      %p183 = scmp.eq.s32.totalorder %s27, 0
      %p184 = por %p182, %p183
      %p185 = scmp.ne.s32.totalorder %s171, %s172
      %p186 = scmp.eq.s32.totalorder %s28, 1
      %p187 = por %p185, %p186
      %p189 = scmp.ne.s32.totalorder %s172, %s188
      %p190 = scmp.eq.s32.totalorder %s28, 0
      %p191 = por %p189, %p190
      %p192 = scmp.le.s32.totalorder 1, %s22
      %p193 = scmp.lt.s32.totalorder %s22, 3
      %p194 = pnand %p192, %p193
      %p195 = pneg %p194
      // Predicated region
      $region9: #{tpu_custom_call.1} parent=5 // pred_check
        _
      $region10: #{tpu_custom_call.1} parent=5 // pred_check_branch
        %197 = sbr.rel (%p194) target = $region12
      $region11: #{tpu_custom_call.1} parent=5 // pred_region
        %s198 = ssub.s32 %s22, 1
        // Predicated region
        $region13: #{tpu_custom_call.1} parent=11 // pred_check
          %p199 = pneg %p95
        $region14: #{tpu_custom_call.1} parent=11 // pred_check_branch
          %201 = sbr.rel (%p199) target = $region16
        $region15: #{tpu_custom_call.1} parent=11 // pred_region
          %203 = vsyncadd [#allocation6], 0
          %s204 = sshll.u32 %s2, 4
          %s205 = int_to_ptr.hbm [resolvable:$true] %s204
          %s206 = sshll.u32 [#allocation7], 4
          %s207 = int_to_ptr.vmem [resolvable:$true] %s206
          %212 = dma.hbm_to_vmem [thread:$0]  %s205, 256, %s207, [#allocation6], 128, 128, 8
        $region16: #{tpu_custom_call.1} parent=11 // pred_fallthru
          _
        // Predicated region
        $region17: #{tpu_custom_call.1} parent=11 // pred_check
          %p213 = pneg %p116
        $region18: #{tpu_custom_call.1} parent=11 // pred_check_branch
          %215 = sbr.rel (%p213) target = $region20
        $region19: #{tpu_custom_call.1} parent=11 // pred_region
          _
        $region20: #{tpu_custom_call.1} parent=11 // pred_fallthru
          _
        // Predicated region
        $region21: #{tpu_custom_call.1} parent=11 // pred_check
          %p216 = pneg %p137
        $region22: #{tpu_custom_call.1} parent=11 // pred_check_branch
          %218 = sbr.rel (%p216) target = $region24
        $region23: #{tpu_custom_call.1} parent=11 // pred_region
          %220 = vsyncadd [#allocation9], 0
          %s221 = sshll.u32 %s4, 4
          %s222 = int_to_ptr.hbm [resolvable:$true] %s221
          %s223 = sshll.u32 [#allocation8], 4
          %s224 = int_to_ptr.vmem [resolvable:$true] %s223
          %229 = dma.hbm_to_vmem [thread:$0]  %s222, 512, %s224, [#allocation9], 128, 128, 8
        $region24: #{tpu_custom_call.1} parent=11 // pred_fallthru
          _
        // Predicated region
        $region25: #{tpu_custom_call.1} parent=11 // pred_check
          %p230 = pneg %p158
        $region26: #{tpu_custom_call.1} parent=11 // pred_check_branch
          %232 = sbr.rel (%p230) target = $region28
        $region27: #{tpu_custom_call.1} parent=11 // pred_region
          _
        $region28: #{tpu_custom_call.1} parent=11 // pred_fallthru
          _
      $region12: #{tpu_custom_call.1} parent=5 // pred_fallthru
        _
      %p233 = scmp.lt.s32.totalorder %s22, 2
      // Predicated region
      $region29: #{tpu_custom_call.1} parent=5 // pred_check
        %p234 = pneg %p233
      $region30: #{tpu_custom_call.1} parent=5 // pred_check_branch
        %236 = sbr.rel (%p234) target = $region32
      $region31: #{tpu_custom_call.1} parent=5 // pred_region
        // Predicated region
        $region33: #{tpu_custom_call.1} parent=31 // pred_check
          %p237 = pneg %p42
        $region34: #{tpu_custom_call.1} parent=31 // pred_check_branch
          %239 = sbr.rel (%p237) target = $region36
        $region35: #{tpu_custom_call.1} parent=31 // pred_region
          %s240 = sand.u32 %s32, 1
          %s241 = scalar_lea.sflag [#allocation3], %s240
          %s242 = sand.u32 %s32, 1
          %s243 = smul.addr %s242, 16
          %s244 = scalar_lea.vmem [#allocation2], %s243
          %s245 = smul.u32 2, %s22
          %247 = vsyncadd %s241, 0
          %s248 = smul.addr %s245, 8
          %s249 = scalar_lea.hbm %s0, %s248
          %s250 = sshll.u32 %s249, 4
          %s251 = int_to_ptr.hbm [resolvable:$true] %s250
          %s252 = sshll.u32 %s244, 4
          %s253 = int_to_ptr.vmem [resolvable:$true] %s252
          %258 = dma.hbm_to_vmem [thread:$0]  %s251, 256, %s253, %s241, 128, 128, 8
        $region36: #{tpu_custom_call.1} parent=31 // pred_fallthru
          _
        // Predicated region
        $region37: #{tpu_custom_call.1} parent=31 // pred_check
          %p259 = pneg %p68
        $region38: #{tpu_custom_call.1} parent=31 // pred_check_branch
          %261 = sbr.rel (%p259) target = $region40
        $region39: #{tpu_custom_call.1} parent=31 // pred_region
          %s262 = sand.u32 %s22, 1
          %s263 = scalar_lea.sflag [#allocation6], %s262
          %s264 = sand.u32 %s58, 1
          %s265 = smul.addr %s264, 16
          %s266 = scalar_lea.vmem [#allocation5], %s265
          %s267 = smul.u32 2, %s22
          %269 = vsyncadd %s263, 0
          %s270 = smul.addr %s267, 8
          %s271 = scalar_lea.hbm %s1, %s270
          %s272 = sshll.u32 %s271, 4
          %s273 = int_to_ptr.hbm [resolvable:$true] %s272
          %s274 = sshll.u32 %s266, 4
          %s275 = int_to_ptr.vmem [resolvable:$true] %s274
          %280 = dma.hbm_to_vmem [thread:$0]  %s273, 256, %s275, %s263, 128, 128, 8
        $region40: #{tpu_custom_call.1} parent=31 // pred_fallthru
          _
      $region32: #{tpu_custom_call.1} parent=5 // pred_fallthru
        _
      %p281 = scmp.le.s32.totalorder 1, %s22
      %p282 = scmp.lt.s32.totalorder %s22, 3
      %p283 = pnand %p281, %p282
      %p284 = pneg %p283
      // Predicated region
      $region41: #{tpu_custom_call.1} parent=5 // pred_check
        _
      $region42: #{tpu_custom_call.1} parent=5 // pred_check_branch
        %286 = sbr.rel (%p283) target = $region44
      $region43: #{tpu_custom_call.1} parent=5 // pred_region
        %s287 = ssub.s32 %s22, 1
        %s288 = sand.u32 %s35, 1
        %s289 = scalar_lea.sflag [#allocation3], %s288
        %s290 = sand.u32 %s35, 1
        %s291 = smul.addr %s290, 16
        %s292 = scalar_lea.vmem [#allocation2], %s291
        // Predicated region
        $region45: #{tpu_custom_call.1} parent=43 // pred_check
          %p293 = pneg %p48
        $region46: #{tpu_custom_call.1} parent=43 // pred_check_branch
          %295 = sbr.rel (%p293) target = $region48
        $region47: #{tpu_custom_call.1} parent=43 // pred_region
          %297 = dma.done %s289, 256
        $region48: #{tpu_custom_call.1} parent=43 // pred_fallthru
          _
        %s298 = sand.u32 %s27, 1
        %s299 = scalar_lea.sflag [#allocation6], %s298
        %s300 = sand.u32 %s61, 1
        %s301 = smul.addr %s300, 16
        %s302 = scalar_lea.vmem [#allocation5], %s301
        // Predicated region
        $region49: #{tpu_custom_call.1} parent=43 // pred_check
          %p303 = pneg %p74
        $region50: #{tpu_custom_call.1} parent=43 // pred_check_branch
          %305 = sbr.rel (%p303) target = $region52
        $region51: #{tpu_custom_call.1} parent=43 // pred_region
          %307 = dma.done %s299, 256
        $region52: #{tpu_custom_call.1} parent=43 // pred_fallthru
          _
        // Predicated region
        $region53: #{tpu_custom_call.1} parent=43 // pred_check
          %p308 = pneg %p95
        $region54: #{tpu_custom_call.1} parent=43 // pred_check_branch
          %310 = sbr.rel (%p308) target = $region56
        $region55: #{tpu_custom_call.1} parent=43 // pred_region
          %312 = dma.done [#allocation6], 256
        $region56: #{tpu_custom_call.1} parent=43 // pred_fallthru
          _
        // Predicated region
        $region57: #{tpu_custom_call.1} parent=43 // pred_check
          %p313 = pneg %p137
        $region58: #{tpu_custom_call.1} parent=43 // pred_check_branch
          %315 = sbr.rel (%p313) target = $region60
        $region59: #{tpu_custom_call.1} parent=43 // pred_region
          %317 = dma.done [#allocation9], 512
        $region60: #{tpu_custom_call.1} parent=43 // pred_fallthru
          _
        %s318 = sand.u32 %s35, 1
        %s319 = scalar_lea.sflag [#allocation3], %s318
        %s320 = sand.u32 %s35, 1
        %s321 = smul.addr %s320, 16
        %s322 = scalar_lea.vmem [#allocation2], %s321
        %p323 = pneg %p48
        %p324 = pneg %p45
        %s325 = sand.u32 %s27, 1
        %s326 = scalar_lea.sflag [#allocation6], %s325
        %s327 = sand.u32 %s61, 1
        %s328 = smul.addr %s327, 16
        %s329 = scalar_lea.vmem [#allocation5], %s328
        %p330 = pneg %p74
        %p331 = pneg %p71
        %p332 = pneg %p95
        %p333 = pneg %p92
        %p334 = pneg %p116
        %p335 = pneg %p113
        %p336 = pneg %p137
        %p337 = pneg %p134
        %p338 = pneg %p158
        %p339 = pneg %p155
        %p340 = pneg %p184
        %p341 = pneg %p181
        %s342 = sand.u32 %s171, 1
        %s343 = scalar_lea.sflag [#allocation4], %s342
        %s344 = sand.u32 %s171, 1
        %s345 = smul.addr %s344, 16
        %s346 = scalar_lea.vmem [#allocation10], %s345
        %s347 = smul.u32 2, %s27
        %s348 = smul.u32 2, %s27
        %s349 = smul.u32 2, %s27
        %v350 = vld [vmem:[%s292] sm:$0xff]
        %v351 = vld [vmem:[%s292 + $0x8] sm:$0xff]
        %v352 = vld [vmem:[#allocation7] sm:$0xff]
        %v353 = vld [vmem:[#allocation7 + $0x8] sm:$0xff]
        %v354 = vld [vmem:[%s3] sm:$0x1]
        %v356 = vperm.slane %v354, 0
        %vm358 = vcmask 130048
        %v360 = vsel %vm358, %v350, 0
        %v363 = vsel %vm358, %v351, 0
        %365 = vmatpush.msra.mxu0 0.0
        %366 = vmatpush.msra.mxu0 0.0
        %367 = vmatpush.msra.mxu0 0.0
        %368 = vmatpush.msra.mxu0 0.0
        %369 = vmatpush.msra.mxu0 0.0
        %370 = vmatpush.msra.mxu0 0.0
        %371 = vmatpush.msra.mxu0 0.0
        %372 = vmatpush.msra.mxu0 0.0
        %373 = vmatpush.msra.mxu0 0.0
        %374 = vmatpush.msra.mxu0 0.0
        %375 = vmatpush.msra.mxu0 0.0
        %376 = vmatpush.msra.mxu0 0.0
        %377 = vmatpush.msra.mxu0 0.0
        %378 = vmatpush.msra.mxu0 0.0
        %379 = vmatpush.msra.mxu0 %v353
        %380 = vmatpush.msra.mxu0 %v352
        %381 = vmatmul.f32.gmra.mxu0 %v360
        %v382 = vpop.f32.mrf.mxu0
        %v383 = vadd.f32 %v356, %v382
        %384 = vmatmul.f32.gmra.mxu0 %v363
        %v385 = vpop.f32.mrf.mxu0
        %v386 = vadd.f32 %v356, %v385
        %387 = vdwg.mxu0
        %v388 = vmax.f32 %v383, 0.0
        %v389 = vmax.f32 %v386, 0.0
        %v390 = vld [vmem:[%s302] sm:$0xff]
        %v391 = vld [vmem:[%s302 + $0x8] sm:$0xff]
        %vm392 = vcmask 64512
        %v394 = vsel %vm392, %v390, 0
        %396 = vmatpush.msra.mxu0 0.0
        %397 = vmatpush.msra.mxu0 0.0
        %398 = vmatpush.msra.mxu0 0.0
        %399 = vmatpush.msra.mxu0 0.0
        %400 = vmatpush.msra.mxu0 0.0
        %401 = vmatpush.msra.mxu0 0.0
        %402 = vmatpush.msra.mxu0 0.0
        %403 = vmatpush.msra.mxu0 0.0
        %404 = vmatpush.msra.mxu0 0.0
        %405 = vmatpush.msra.mxu0 0.0
        %406 = vmatpush.msra.mxu0 0.0
        %407 = vmatpush.msra.mxu0 0.0
        %408 = vmatpush.msra.mxu0 0.0
        %409 = vmatpush.msra.mxu0 0.0
        %410 = vmatpush.msra.mxu0 0.0
        %411 = vmatpush.msra.mxu0 %v388
        %412 = vmatmul.f32.gmra.mxu0 %v394
        %v413 = vpop.f32.mrf.mxu0
        %v414 = vadd.f32 0.0, %v413
        %415 = vdwg.mxu0
        %v417 = vsel %vm392, %v391, 0
        %419 = vmatpush.msra.mxu0 0.0
        %420 = vmatpush.msra.mxu0 0.0
        %421 = vmatpush.msra.mxu0 0.0
        %422 = vmatpush.msra.mxu0 0.0
        %423 = vmatpush.msra.mxu0 0.0
        %424 = vmatpush.msra.mxu0 0.0
        %425 = vmatpush.msra.mxu0 0.0
        %426 = vmatpush.msra.mxu0 0.0
        %427 = vmatpush.msra.mxu0 0.0
        %428 = vmatpush.msra.mxu0 0.0
        %429 = vmatpush.msra.mxu0 0.0
        %430 = vmatpush.msra.mxu0 0.0
        %431 = vmatpush.msra.mxu0 0.0
        %432 = vmatpush.msra.mxu0 0.0
        %433 = vmatpush.msra.mxu0 0.0
        %434 = vmatpush.msra.mxu0 %v389
        %435 = vmatmul.f32.gmra.mxu0 %v417
        %v436 = vpop.f32.mrf.mxu0
        %v437 = vadd.f32 0.0, %v436
        %438 = vdwg.mxu0
        %v439 = vld [vmem:[#allocation8] sm:$0xff]
        %v440 = vld [vmem:[#allocation8 + $0x8] sm:$0xff]
        %v441 = vld [vmem:[#allocation8 + $0x10] sm:$0xff]
        %v442 = vld [vmem:[#allocation8 + $0x18] sm:$0xff]
        %v443 = vld [vmem:[%s5] sm:$0x1]
        %v445 = vperm.slane %v443, 0
        %vm447 = vcmask 261120
        %v449 = vsel %vm447, %v414, 0
        %v452 = vsel %vm447, %v437, 0
        %454 = vmatpush.msra.mxu0 0.0
        %455 = vmatpush.msra.mxu0 0.0
        %456 = vmatpush.msra.mxu0 0.0
        %457 = vmatpush.msra.mxu0 0.0
        %458 = vmatpush.msra.mxu0 0.0
        %459 = vmatpush.msra.mxu0 0.0
        %460 = vmatpush.msra.mxu0 0.0
        %461 = vmatpush.msra.mxu0 0.0
        %462 = vmatpush.msra.mxu0 0.0
        %463 = vmatpush.msra.mxu0 0.0
        %464 = vmatpush.msra.mxu0 0.0
        %465 = vmatpush.msra.mxu0 0.0
        %466 = vmatpush.msra.mxu0 %v442
        %467 = vmatpush.msra.mxu0 %v441
        %468 = vmatpush.msra.mxu0 %v440
        %469 = vmatpush.msra.mxu0 %v439
        %470 = vmatmul.f32.gmra.mxu0 %v449
        %v471 = vpop.f32.mrf.mxu0
        %v472 = vadd.f32 %v445, %v471
        %473 = vmatmul.f32.gmra.mxu0 %v452
        %v474 = vpop.f32.mrf.mxu0
        %v475 = vadd.f32 %v445, %v474
        %476 = vdwg.mxu0
        %v477 = vmax.f32 %v472, 0.0
        %v478 = vmax.f32 %v475, 0.0
        %479 = vst.msk [vmem:[%s346] sm:$0xff] %vm447, %v477
        %480 = vst.msk [vmem:[%s346 + $0x8] sm:$0xff] %vm447, %v478
        %s481 = sand.u32 %s171, 1
        %s482 = scalar_lea.sflag [#allocation4], %s481
        %s483 = sand.u32 %s171, 1
        %s484 = smul.addr %s483, 16
        %s485 = scalar_lea.vmem [#allocation10], %s484
        // Predicated region
        $region61: #{tpu_custom_call.1} parent=43 // pred_check
          %p486 = pneg %p181
        $region62: #{tpu_custom_call.1} parent=43 // pred_check_branch
          %488 = sbr.rel (%p486) target = $region64
        $region63: #{tpu_custom_call.1} parent=43 // pred_region
          %s489 = smul.u32 2, %s27
          %491 = vsyncadd %s482, 0
          %s492 = smul.addr %s489, 8
          %s493 = scalar_lea.hbm %s6, %s492
          %s494 = sshll.u32 %s485, 4
          %s495 = int_to_ptr.vmem [resolvable:$true] %s494
          %s496 = sshll.u32 %s493, 4
          %s497 = int_to_ptr.hbm [resolvable:$true] %s496
          %502 = dma.vmem_to_hbm [thread:$0]  %s495, 256, %s497, %s482, 128, 128, 8
        $region64: #{tpu_custom_call.1} parent=43 // pred_fallthru
          _
      $region44: #{tpu_custom_call.1} parent=5 // pred_fallthru
        _
      %p503 = scmp.le.s32.totalorder 2, %s22
      // Predicated region
      $region65: #{tpu_custom_call.1} parent=5 // pred_check
        %p504 = pneg %p503
      $region66: #{tpu_custom_call.1} parent=5 // pred_check_branch
        %506 = sbr.rel (%p504) target = $region68
      $region67: #{tpu_custom_call.1} parent=5 // pred_region
        %s507 = ssub.s32 %s22, 2
        // Predicated region
        $region69: #{tpu_custom_call.1} parent=67 // pred_check
          %p508 = pneg %p187
        $region70: #{tpu_custom_call.1} parent=67 // pred_check_branch
          %510 = sbr.rel (%p508) target = $region72
        $region71: #{tpu_custom_call.1} parent=67 // pred_region
          %s511 = sand.u32 %s172, 1
          %s512 = scalar_lea.sflag [#allocation4], %s511
          %s513 = sand.u32 %s172, 1
          %s514 = smul.addr %s513, 16
          %s515 = scalar_lea.vmem [#allocation10], %s514
          %517 = dma.done %s512, 256
        $region72: #{tpu_custom_call.1} parent=67 // pred_fallthru
          _
      $region68: #{tpu_custom_call.1} parent=5 // pred_fallthru
        _
    $region6: #{tpu_custom_call.1} parent=1 // loop_footer
      %s26 = sadd.s32 1, %s22
    $region7: #{tpu_custom_call.1} parent=1 // loop_footer_branch
      %21 = sbr.rel target = $region3
    $region8: #{tpu_custom_call.1} parent=1 // loop_exit
      _
    %518 = vsyncpa [#allocation3], 1
    %s519 = scalar_lea.sflag [#allocation3], 1
    %520 = vsyncpa %s519, 1
    %521 = vsyncpa [#allocation6], 1
    %s522 = scalar_lea.sflag [#allocation6], 1
    %523 = vsyncpa %s522, 1
    %524 = vsyncpa [#allocation9], 1
    %525 = vsyncpa [#allocation4], 1
    %s526 = scalar_lea.sflag [#allocation4], 1
    %527 = vsyncpa %s526, 1

</llo_original>
